<compile_context>
chip_gen: v6e
topology: v6e:2x2x1
jax: 0.10.0
libtpu: 0.0.40
codegen_flags: <defaults>
</compile_context>

<pallas_src>
import math
import jax
import jax.numpy as jnp
from jax import lax
from jax.experimental import pallas as pl
from jax.experimental.pallas import tpu as pltpu

EPS = 1e-5


# --------------------------------- kernel -------------------------------------
def _make_kernel(N, L, Cin, Cout):
    """Builds the BaseBlock kernel for static (N, L, Cin, Cout)."""
    NL = N * L

    def kernel(x_ref,
               w1_ref, b2_ref,
               g1a_ref, be1a_ref,
               w1b_ref, g1b_ref, be1b_ref,
               w1c_ref, b1c_ref,
               go_ref, beo_ref,
               out_ref):
        cnt = float(NL)                      # BN statistics count = N * L

        # local position l = (lane index) mod L, built once; boundary masks
        # (zero out taps that would cross a sample boundary, i.e. the conv
        # zero-padding) built once per distinct shift and reused by every
        # im2col (the K=5 shift set is a subset of the K=11 set).
        lane = lax.broadcasted_iota(jnp.int32, (1, NL), 1)
        if (L & (L - 1)) == 0:
            local = lane & (L - 1)
        else:
            local = lane % L
        masks = {}
        for s in range(-5, 6):
            if s == 0:
                continue
            masks[s] = (local < (L - s)) if s > 0 else (local >= (-s))

        def shifted(y, s):
            # shifted[c, g] == y[c, g + s] if the shift stays inside the same
            # sample, else 0.  pltpu.roll: roll(y, r)[j] = y[(j - r) % NL]
            # -> r = -s.
            if s == 0:
                return y
            r = pltpu.roll(y, shift=(-s) % NL, axis=1)
            return jnp.where(masks[s], r, 0.0)

        def im2col_bf16(y, K):
            # (K * Cin, NL) slab; row k*Cin + ci holds input channel ci
            # shifted by (k - K//2).  Cast to bf16 only at the MXU operand.
            P = K // 2
            slab = jnp.concatenate([shifted(y, k - P) for k in range(K)],
                                   axis=0)
            return slab.astype(jnp.bfloat16)

        def bn(y, gamma, beta):
            # training-mode BatchNorm1d over (N, L) per channel (stacked lane
            # axis).  Two-pass variance kept for numerical robustness.
            mean = jnp.sum(y, axis=-1, keepdims=True) / cnt
            var = jnp.sum((y - mean) ** 2, axis=-1, keepdims=True) / cnt
            scale = gamma * lax.rsqrt(var + EPS)
            shift = beta - mean * scale
            return y * scale + shift

        # Batch-stack in VMEM: (N, Cin, L) -> (Cin, N*L), lane = n*L + l.
        xs = jnp.concatenate([x_ref[n] for n in range(N)], axis=-1)

        # conv1[0] (k=11, p=5) and conv2 (k=11, p=5) fused: same input slab,
        # concatenated output channels, single bf16 MXU matmul (f32 acc).
        fused = jnp.dot(w1_ref[...], im2col_bf16(xs, 11),
                        preferred_element_type=jnp.float32)
        y1 = fused[:Cin]                       # conv1[0]; bias dropped (BN next)
        y4 = fused[Cin:] + b2_ref[...]         # conv2 keeps its bias

        # BN -> ReLU
        y1 = jnp.maximum(bn(y1, g1a_ref[...], be1a_ref[...]), 0.0)

        # conv1[3] (k=5, p=2) -> BN -> ReLU   (bias dropped: BN follows)
        y2 = jnp.dot(w1b_ref[...], im2col_bf16(y1, 5),
                     preferred_element_type=jnp.float32)
        y2 = jnp.maximum(bn(y2, g1b_ref[...], be1b_ref[...]), 0.0)

        # conv1[6] (k=5, p=2)  (bias kept: feeds the ReLU before final BN)
        y3 = jnp.dot(w1c_ref[...], im2col_bf16(y2, 5),
                     preferred_element_type=jnp.float32) + b1c_ref[...]

        # residual add -> ReLU -> final BN
        z = jnp.maximum(y3 + y4, 0.0)
        zbn = bn(z, go_ref[...], beo_ref[...])

        # Unstack in VMEM: (Cout, N*L) -> (N, Cout, L) (128-aligned lane slices).
        for n in range(N):
            out_ref[n] = zbn[:, n * L:(n + 1) * L].astype(out_ref.dtype)

    return kernel


# ------------------------ one-time parameter preparation -----------------------
def prepare_params(params):
    """Hoisted per-model weight prep: call once, reuse across forwards."""
    def w2d(w):
        # (Co, Ci, K) -> (Co, K*Ci) with column index k*Ci + ci, matching the
        # im2col slab row order built inside the kernel.  bf16 MXU operands.
        Co, Ci, K = w.shape
        return jnp.transpose(w, (0, 2, 1)).reshape(Co, K * Ci).astype(jnp.bfloat16)

    col = lambda v: v.reshape(-1, 1).astype(jnp.float32)

    # Fuse conv1[0] and conv2 weights along output channels (same input slab).
    # conv1[0] bias is dropped (cancelled by the following training-mode BN);
    # conv1[3] bias likewise; conv2 / conv1[6] biases are kept.
    w1 = jnp.concatenate([w2d(params["w1a"]), w2d(params["w2"])], axis=0)

    return (w1,
            col(params["b2"]),
            col(params["g1a"]), col(params["be1a"]),
            w2d(params["w1b"]),
            col(params["g1b"]), col(params["be1b"]),
            w2d(params["w1c"]), col(params["b1c"]),
            col(params["go"]), col(params["beo"]))


# ------------------------------- wrapper --------------------------------------
def baseblock_forward(x, prepped):
    N, Cin, L = x.shape
    Cout = prepped[0].shape[0] - Cin

    kargs = (x,) + tuple(prepped)
    return pl.pallas_call(
        _make_kernel(N, L, Cin, Cout),
        out_shape=jax.ShapeDtypeStruct((N, Cout, L), jnp.float32),
        in_specs=[pl.BlockSpec(memory_space=pltpu.MemorySpace.VMEM)] * len(kargs),
        out_specs=pl.BlockSpec(memory_space=pltpu.MemorySpace.VMEM),
    )(*kargs)


# ------------------------- deterministic parameters ---------------------------
def init_params(key, cin, cout):
    keys = jax.random.split(key, 14)

    def conv(kw, kb, co, ci, K):
        bound = 1.0 / math.sqrt(ci * K)
        w = jax.random.uniform(kw, (co, ci, K), jnp.float32, -bound, bound)
        b = jax.random.uniform(kb, (co,), jnp.float32, -bound, bound)
        return w, b

    w1a, b1a = conv(keys[0], keys[1], cin, cin, 11)
    w1b, b1b = conv(keys[2], keys[3], cin, cin, 5)
    w1c, b1c = conv(keys[4], keys[5], cout, cin, 5)
    w2, b2 = conv(keys[6], keys[7], cout, cin, 11)

    def bn(kg, kb, cdim):
        g = 1.0 + 0.1 * jax.random.uniform(kg, (cdim,), jnp.float32, -1.0, 1.0)
        b = 0.05 * jax.random.uniform(kb, (cdim,), jnp.float32, -1.0, 1.0)
        return g, b

    g1a, be1a = bn(keys[8], keys[9], cin)
    g1b, be1b = bn(keys[10], keys[11], cin)
    go, beo = bn(keys[12], keys[13], cout)

    return dict(w1a=w1a, b1a=b1a, g1a=g1a, be1a=be1a,
                w1b=w1b, b1b=b1b, g1b=g1b, be1b=be1b,
                w1c=w1c, b1c=b1c,
                w2=w2, b2=b2,
                go=go, beo=beo)


# ------------------------------ JAX reference ----------------------------------
def _conv1d_ref(x, w, b, pad):
    out = lax.conv_general_dilated(
        x, w, window_strides=(1,), padding=[(pad, pad)],
        dimension_numbers=("NCH", "OIH", "NCH"))
    return out + b[None, :, None]


def _bn_ref(x, gamma, beta):
    mean = jnp.mean(x, axis=(0, 2), keepdims=True)
    var = jnp.mean((x - mean) ** 2, axis=(0, 2), keepdims=True)
    return ((x - mean) * lax.rsqrt(var + EPS)
            * gamma[None, :, None] + beta[None, :, None])


def baseblock_ref(x, p):
    y = _conv1d_ref(x, p["w1a"], p["b1a"], 5)
    y = jax.nn.relu(_bn_ref(y, p["g1a"], p["be1a"]))
    y = _conv1d_ref(y, p["w1b"], p["b1b"], 2)
    y = jax.nn.relu(_bn_ref(y, p["g1b"], p["be1b"]))
    y1 = _conv1d_ref(y, p["w1c"], p["b1c"], 2)
    y2 = _conv1d_ref(x, p["w2"], p["b2"], 5)
    return _bn_ref(jax.nn.relu(y1 + y2), p["go"], p["beo"])


# ---------------------------------- main ---------------------------------------
if __name__ == "__main__":
    N, CIN, COUT, L = 2, 8, 16, 128
    key = jax.random.PRNGKey(0)
    kx, kp = jax.random.split(key)
    x = jax.random.normal(kx, (N, CIN, L), jnp.float32)
    params = init_params(kp, CIN, COUT)

    prepped = prepare_params(params)          # one-time, outside the forward
    out = baseblock_forward(x, prepped)
    out = jax.block_until_ready(out)

    ref = baseblock_ref(x, params)
    assert out.shape == (N, COUT, L), out.shape
    # Tolerance sized for bf16 MXU operand rounding through 3 convs + 3 BNs
    # (the reference uses default matmul precision, same operand rounding class).
    if not jnp.allclose(out, ref, atol=2e-2, rtol=2e-2):
        raise AssertionError(
            f"kernel/reference mismatch, max abs err = {jnp.max(jnp.abs(out - ref))}")
    print("KERNEL_OK")
</pallas_src>

<mosaic_0001>
module attributes {stable_mosaic.version = 11 : i64} {
  func.func @kernel(%arg0: memref<2x8x128xf32, #tpu.memory_space<vmem>>, %arg1: memref<24x88xbf16, #tpu.memory_space<vmem>>, %arg2: memref<16x1xf32, #tpu.memory_space<vmem>>, %arg3: memref<8x1xf32, #tpu.memory_space<vmem>>, %arg4: memref<8x1xf32, #tpu.memory_space<vmem>>, %arg5: memref<8x40xbf16, #tpu.memory_space<vmem>>, %arg6: memref<8x1xf32, #tpu.memory_space<vmem>>, %arg7: memref<8x1xf32, #tpu.memory_space<vmem>>, %arg8: memref<16x40xbf16, #tpu.memory_space<vmem>>, %arg9: memref<16x1xf32, #tpu.memory_space<vmem>>, %arg10: memref<16x1xf32, #tpu.memory_space<vmem>>, %arg11: memref<16x1xf32, #tpu.memory_space<vmem>>, %arg12: memref<2x16x128xf32, #tpu.memory_space<vmem>>) attributes {dimension_semantics = [], scalar_prefetch = 0 : i64, scratch_operands = 0 : i64, tpu.core_type = #tpu.core_type<tc>} {
    %0 = tpu.iota {dimensions = array<i32: 1>} : vector<1x256xi32>
    %c127_i32 = arith.constant 127 : i32
    %1 = vector.broadcast %c127_i32 : i32 to vector<1x256xi32>
    %2 = arith.andi %0, %1 : vector<1x256xi32>
    %c5_i32 = arith.constant 5 : i32
    %3 = vector.broadcast %c5_i32 : i32 to vector<1x256xi32>
    %4 = arith.cmpi sge, %2, %3 : vector<1x256xi32>
    %c4_i32 = arith.constant 4 : i32
    %5 = vector.broadcast %c4_i32 : i32 to vector<1x256xi32>
    %6 = arith.cmpi sge, %2, %5 : vector<1x256xi32>
    %c3_i32 = arith.constant 3 : i32
    %7 = vector.broadcast %c3_i32 : i32 to vector<1x256xi32>
    %8 = arith.cmpi sge, %2, %7 : vector<1x256xi32>
    %c2_i32 = arith.constant 2 : i32
    %9 = vector.broadcast %c2_i32 : i32 to vector<1x256xi32>
    %10 = arith.cmpi sge, %2, %9 : vector<1x256xi32>
    %c1_i32 = arith.constant 1 : i32
    %11 = vector.broadcast %c1_i32 : i32 to vector<1x256xi32>
    %12 = arith.cmpi sge, %2, %11 : vector<1x256xi32>
    %c127_i32_0 = arith.constant 127 : i32
    %13 = vector.broadcast %c127_i32_0 : i32 to vector<1x256xi32>
    %14 = arith.cmpi slt, %2, %13 : vector<1x256xi32>
    %c126_i32 = arith.constant 126 : i32
    %15 = vector.broadcast %c126_i32 : i32 to vector<1x256xi32>
    %16 = arith.cmpi slt, %2, %15 : vector<1x256xi32>
    %c125_i32 = arith.constant 125 : i32
    %17 = vector.broadcast %c125_i32 : i32 to vector<1x256xi32>
    %18 = arith.cmpi slt, %2, %17 : vector<1x256xi32>
    %c124_i32 = arith.constant 124 : i32
    %19 = vector.broadcast %c124_i32 : i32 to vector<1x256xi32>
    %20 = arith.cmpi slt, %2, %19 : vector<1x256xi32>
    %c123_i32 = arith.constant 123 : i32
    %21 = vector.broadcast %c123_i32 : i32 to vector<1x256xi32>
    %22 = arith.cmpi slt, %2, %21 : vector<1x256xi32>
    %c0 = arith.constant 0 : index
    %c0_1 = arith.constant 0 : index
    %c0_2 = arith.constant 0 : index
    %23 = vector.load %arg0[%c0, %c0_1, %c0_2] : memref<2x8x128xf32, #tpu.memory_space<vmem>>, vector<1x8x128xf32>
    %24 = vector.shape_cast %23 : vector<1x8x128xf32> to vector<8x128xf32>
    %c1 = arith.constant 1 : index
    %c0_3 = arith.constant 0 : index
    %c0_4 = arith.constant 0 : index
    %25 = vector.load %arg0[%c1, %c0_3, %c0_4] : memref<2x8x128xf32, #tpu.memory_space<vmem>>, vector<1x8x128xf32>
    %26 = vector.shape_cast %25 : vector<1x8x128xf32> to vector<8x128xf32>
    %27 = tpu.concatenate %24, %26 in 1 : vector<8x128xf32>, vector<8x128xf32> -> vector<8x256xf32>
    %c0_5 = arith.constant 0 : index
    %c0_6 = arith.constant 0 : index
    %28 = vector.load %arg1[%c0_5, %c0_6] : memref<24x88xbf16, #tpu.memory_space<vmem>>, vector<24x88xbf16>
    %c5_i32_7 = arith.constant 5 : i32
    %29 = tpu.dynamic_rotate %27 by %c5_i32_7 dim 1 : vector<8x256xf32>, i32 -> vector<8x256xf32>
    %cst = arith.constant 0.000000e+00 : f32
    %30 = vector.shape_cast %4 : vector<1x256xi1> to vector<1x256xi1>
    %31 = vector.broadcast %30 : vector<1x256xi1> to vector<8x256xi1>
    %32 = vector.broadcast %cst : f32 to vector<8x256xf32>
    %33 = arith.select %31, %29, %32 : vector<8x256xi1>, vector<8x256xf32>
    %c4_i32_8 = arith.constant 4 : i32
    %34 = tpu.dynamic_rotate %27 by %c4_i32_8 dim 1 : vector<8x256xf32>, i32 -> vector<8x256xf32>
    %cst_9 = arith.constant 0.000000e+00 : f32
    %35 = vector.shape_cast %6 : vector<1x256xi1> to vector<1x256xi1>
    %36 = vector.broadcast %35 : vector<1x256xi1> to vector<8x256xi1>
    %37 = vector.broadcast %cst_9 : f32 to vector<8x256xf32>
    %38 = arith.select %36, %34, %37 : vector<8x256xi1>, vector<8x256xf32>
    %c3_i32_10 = arith.constant 3 : i32
    %39 = tpu.dynamic_rotate %27 by %c3_i32_10 dim 1 : vector<8x256xf32>, i32 -> vector<8x256xf32>
    %cst_11 = arith.constant 0.000000e+00 : f32
    %40 = vector.shape_cast %8 : vector<1x256xi1> to vector<1x256xi1>
    %41 = vector.broadcast %40 : vector<1x256xi1> to vector<8x256xi1>
    %42 = vector.broadcast %cst_11 : f32 to vector<8x256xf32>
    %43 = arith.select %41, %39, %42 : vector<8x256xi1>, vector<8x256xf32>
    %c2_i32_12 = arith.constant 2 : i32
    %44 = tpu.dynamic_rotate %27 by %c2_i32_12 dim 1 : vector<8x256xf32>, i32 -> vector<8x256xf32>
    %cst_13 = arith.constant 0.000000e+00 : f32
    %45 = vector.shape_cast %10 : vector<1x256xi1> to vector<1x256xi1>
    %46 = vector.broadcast %45 : vector<1x256xi1> to vector<8x256xi1>
    %47 = vector.broadcast %cst_13 : f32 to vector<8x256xf32>
    %48 = arith.select %46, %44, %47 : vector<8x256xi1>, vector<8x256xf32>
    %c1_i32_14 = arith.constant 1 : i32
    %49 = tpu.dynamic_rotate %27 by %c1_i32_14 dim 1 : vector<8x256xf32>, i32 -> vector<8x256xf32>
    %cst_15 = arith.constant 0.000000e+00 : f32
    %50 = vector.shape_cast %12 : vector<1x256xi1> to vector<1x256xi1>
    %51 = vector.broadcast %50 : vector<1x256xi1> to vector<8x256xi1>
    %52 = vector.broadcast %cst_15 : f32 to vector<8x256xf32>
    %53 = arith.select %51, %49, %52 : vector<8x256xi1>, vector<8x256xf32>
    %c255_i32 = arith.constant 255 : i32
    %54 = tpu.dynamic_rotate %27 by %c255_i32 dim 1 : vector<8x256xf32>, i32 -> vector<8x256xf32>
    %cst_16 = arith.constant 0.000000e+00 : f32
    %55 = vector.shape_cast %14 : vector<1x256xi1> to vector<1x256xi1>
    %56 = vector.broadcast %55 : vector<1x256xi1> to vector<8x256xi1>
    %57 = vector.broadcast %cst_16 : f32 to vector<8x256xf32>
    %58 = arith.select %56, %54, %57 : vector<8x256xi1>, vector<8x256xf32>
    %c254_i32 = arith.constant 254 : i32
    %59 = tpu.dynamic_rotate %27 by %c254_i32 dim 1 : vector<8x256xf32>, i32 -> vector<8x256xf32>
    %cst_17 = arith.constant 0.000000e+00 : f32
    %60 = vector.shape_cast %16 : vector<1x256xi1> to vector<1x256xi1>
    %61 = vector.broadcast %60 : vector<1x256xi1> to vector<8x256xi1>
    %62 = vector.broadcast %cst_17 : f32 to vector<8x256xf32>
    %63 = arith.select %61, %59, %62 : vector<8x256xi1>, vector<8x256xf32>
    %c253_i32 = arith.constant 253 : i32
    %64 = tpu.dynamic_rotate %27 by %c253_i32 dim 1 : vector<8x256xf32>, i32 -> vector<8x256xf32>
    %cst_18 = arith.constant 0.000000e+00 : f32
    %65 = vector.shape_cast %18 : vector<1x256xi1> to vector<1x256xi1>
    %66 = vector.broadcast %65 : vector<1x256xi1> to vector<8x256xi1>
    %67 = vector.broadcast %cst_18 : f32 to vector<8x256xf32>
    %68 = arith.select %66, %64, %67 : vector<8x256xi1>, vector<8x256xf32>
    %c252_i32 = arith.constant 252 : i32
    %69 = tpu.dynamic_rotate %27 by %c252_i32 dim 1 : vector<8x256xf32>, i32 -> vector<8x256xf32>
    %cst_19 = arith.constant 0.000000e+00 : f32
    %70 = vector.shape_cast %20 : vector<1x256xi1> to vector<1x256xi1>
    %71 = vector.broadcast %70 : vector<1x256xi1> to vector<8x256xi1>
    %72 = vector.broadcast %cst_19 : f32 to vector<8x256xf32>
    %73 = arith.select %71, %69, %72 : vector<8x256xi1>, vector<8x256xf32>
    %c251_i32 = arith.constant 251 : i32
    %74 = tpu.dynamic_rotate %27 by %c251_i32 dim 1 : vector<8x256xf32>, i32 -> vector<8x256xf32>
    %cst_20 = arith.constant 0.000000e+00 : f32
    %75 = vector.shape_cast %22 : vector<1x256xi1> to vector<1x256xi1>
    %76 = vector.broadcast %75 : vector<1x256xi1> to vector<8x256xi1>
    %77 = vector.broadcast %cst_20 : f32 to vector<8x256xf32>
    %78 = arith.select %76, %74, %77 : vector<8x256xi1>, vector<8x256xf32>
    %79 = tpu.concatenate %33, %38, %43, %48, %53, %27, %58, %63, %68, %73, %78 in 0 : vector<8x256xf32>, vector<8x256xf32>, vector<8x256xf32>, vector<8x256xf32>, vector<8x256xf32>, vector<8x256xf32>, vector<8x256xf32>, vector<8x256xf32>, vector<8x256xf32>, vector<8x256xf32>, vector<8x256xf32> -> vector<88x256xf32>
    %80 = arith.truncf %79 : vector<88x256xf32> to vector<88x256xbf16>
    %cst_21 = arith.constant dense<0.000000e+00> : vector<24x256xf32>
    %81 = tpu.matmul %28, %80, %cst_21 {dimension_numbers = #tpu.dot_dimension_numbers<[1], [0], [0], [1], [0, 0, 1, 1], [], []>} : vector<24x88xbf16>, vector<88x256xbf16>, vector<24x256xf32> -> vector<24x256xf32>
    %82 = vector.extract_strided_slice %81 {offsets = [0, 0], sizes = [8, 256], strides = [1, 1]} : vector<24x256xf32> to vector<8x256xf32>
    %83 = vector.extract_strided_slice %81 {offsets = [8, 0], sizes = [16, 256], strides = [1, 1]} : vector<24x256xf32> to vector<16x256xf32>
    %c0_22 = arith.constant 0 : index
    %c0_23 = arith.constant 0 : index
    %84 = vector.load %arg2[%c0_22, %c0_23] : memref<16x1xf32, #tpu.memory_space<vmem>>, vector<16x1xf32>
    %85 = vector.broadcast %84 : vector<16x1xf32> to vector<16x256xf32>
    %86 = arith.addf %83, %85 : vector<16x256xf32>
    %c0_24 = arith.constant 0 : index
    %c0_25 = arith.constant 0 : index
    %87 = vector.load %arg3[%c0_24, %c0_25] : memref<8x1xf32, #tpu.memory_space<vmem>>, vector<8x1xf32>
    %c0_26 = arith.constant 0 : index
    %c0_27 = arith.constant 0 : index
    %88 = vector.load %arg4[%c0_26, %c0_27] : memref<8x1xf32, #tpu.memory_space<vmem>>, vector<8x1xf32>
    %cst_28 = arith.constant dense<0.000000e+00> : vector<8xf32>
    %89 = vector.multi_reduction <add>, %82, %cst_28 [1] : vector<8x256xf32> to vector<8xf32>
    %90 = vector.shape_cast %89 : vector<8xf32> to vector<8x1xf32>
    %cst_29 = arith.constant 2.560000e+02 : f32
    %91 = vector.broadcast %cst_29 : f32 to vector<8x1xf32>
    %92 = arith.divf %90, %91 : vector<8x1xf32>
    %93 = vector.broadcast %92 : vector<8x1xf32> to vector<8x256xf32>
    %94 = arith.subf %82, %93 : vector<8x256xf32>
    %95 = arith.mulf %94, %94 : vector<8x256xf32>
    %cst_30 = arith.constant dense<0.000000e+00> : vector<8xf32>
    %96 = vector.multi_reduction <add>, %95, %cst_30 [1] : vector<8x256xf32> to vector<8xf32>
    %97 = vector.shape_cast %96 : vector<8xf32> to vector<8x1xf32>
    %cst_31 = arith.constant 2.560000e+02 : f32
    %98 = vector.broadcast %cst_31 : f32 to vector<8x1xf32>
    %99 = arith.divf %97, %98 : vector<8x1xf32>
    %cst_32 = arith.constant 9.99999974E-6 : f32
    %100 = vector.broadcast %cst_32 : f32 to vector<8x1xf32>
    %101 = arith.addf %99, %100 : vector<8x1xf32>
    %102 = math.rsqrt %101 : vector<8x1xf32>
    %103 = arith.mulf %87, %102 : vector<8x1xf32>
    %104 = arith.mulf %92, %103 : vector<8x1xf32>
    %105 = arith.subf %88, %104 : vector<8x1xf32>
    %106 = vector.broadcast %103 : vector<8x1xf32> to vector<8x256xf32>
    %107 = arith.mulf %82, %106 : vector<8x256xf32>
    %108 = vector.broadcast %105 : vector<8x1xf32> to vector<8x256xf32>
    %109 = arith.addf %107, %108 : vector<8x256xf32>
    %cst_33 = arith.constant 0.000000e+00 : f32
    %110 = vector.broadcast %cst_33 : f32 to vector<8x256xf32>
    %111 = arith.maximumf %109, %110 : vector<8x256xf32>
    %c0_34 = arith.constant 0 : index
    %c0_35 = arith.constant 0 : index
    %112 = vector.load %arg5[%c0_34, %c0_35] : memref<8x40xbf16, #tpu.memory_space<vmem>>, vector<8x40xbf16>
    %c2_i32_36 = arith.constant 2 : i32
    %113 = tpu.dynamic_rotate %111 by %c2_i32_36 dim 1 : vector<8x256xf32>, i32 -> vector<8x256xf32>
    %cst_37 = arith.constant 0.000000e+00 : f32
    %114 = vector.shape_cast %10 : vector<1x256xi1> to vector<1x256xi1>
    %115 = vector.broadcast %114 : vector<1x256xi1> to vector<8x256xi1>
    %116 = vector.broadcast %cst_37 : f32 to vector<8x256xf32>
    %117 = arith.select %115, %113, %116 : vector<8x256xi1>, vector<8x256xf32>
    %c1_i32_38 = arith.constant 1 : i32
    %118 = tpu.dynamic_rotate %111 by %c1_i32_38 dim 1 : vector<8x256xf32>, i32 -> vector<8x256xf32>
    %cst_39 = arith.constant 0.000000e+00 : f32
    %119 = vector.shape_cast %12 : vector<1x256xi1> to vector<1x256xi1>
    %120 = vector.broadcast %119 : vector<1x256xi1> to vector<8x256xi1>
    %121 = vector.broadcast %cst_39 : f32 to vector<8x256xf32>
    %122 = arith.select %120, %118, %121 : vector<8x256xi1>, vector<8x256xf32>
    %c255_i32_40 = arith.constant 255 : i32
    %123 = tpu.dynamic_rotate %111 by %c255_i32_40 dim 1 : vector<8x256xf32>, i32 -> vector<8x256xf32>
    %cst_41 = arith.constant 0.000000e+00 : f32
    %124 = vector.shape_cast %14 : vector<1x256xi1> to vector<1x256xi1>
    %125 = vector.broadcast %124 : vector<1x256xi1> to vector<8x256xi1>
    %126 = vector.broadcast %cst_41 : f32 to vector<8x256xf32>
    %127 = arith.select %125, %123, %126 : vector<8x256xi1>, vector<8x256xf32>
    %c254_i32_42 = arith.constant 254 : i32
    %128 = tpu.dynamic_rotate %111 by %c254_i32_42 dim 1 : vector<8x256xf32>, i32 -> vector<8x256xf32>
    %cst_43 = arith.constant 0.000000e+00 : f32
    %129 = vector.shape_cast %16 : vector<1x256xi1> to vector<1x256xi1>
    %130 = vector.broadcast %129 : vector<1x256xi1> to vector<8x256xi1>
    %131 = vector.broadcast %cst_43 : f32 to vector<8x256xf32>
    %132 = arith.select %130, %128, %131 : vector<8x256xi1>, vector<8x256xf32>
    %133 = tpu.concatenate %117, %122, %111, %127, %132 in 0 : vector<8x256xf32>, vector<8x256xf32>, vector<8x256xf32>, vector<8x256xf32>, vector<8x256xf32> -> vector<40x256xf32>
    %134 = arith.truncf %133 : vector<40x256xf32> to vector<40x256xbf16>
    %cst_44 = arith.constant dense<0.000000e+00> : vector<8x256xf32>
    %135 = tpu.matmul %112, %134, %cst_44 {dimension_numbers = #tpu.dot_dimension_numbers<[1], [0], [0], [1], [0, 0, 1, 1], [], []>} : vector<8x40xbf16>, vector<40x256xbf16>, vector<8x256xf32> -> vector<8x256xf32>
    %c0_45 = arith.constant 0 : index
    %c0_46 = arith.constant 0 : index
    %136 = vector.load %arg6[%c0_45, %c0_46] : memref<8x1xf32, #tpu.memory_space<vmem>>, vector<8x1xf32>
    %c0_47 = arith.constant 0 : index
    %c0_48 = arith.constant 0 : index
    %137 = vector.load %arg7[%c0_47, %c0_48] : memref<8x1xf32, #tpu.memory_space<vmem>>, vector<8x1xf32>
    %cst_49 = arith.constant dense<0.000000e+00> : vector<8xf32>
    %138 = vector.multi_reduction <add>, %135, %cst_49 [1] : vector<8x256xf32> to vector<8xf32>
    %139 = vector.shape_cast %138 : vector<8xf32> to vector<8x1xf32>
    %cst_50 = arith.constant 2.560000e+02 : f32
    %140 = vector.broadcast %cst_50 : f32 to vector<8x1xf32>
    %141 = arith.divf %139, %140 : vector<8x1xf32>
    %142 = vector.broadcast %141 : vector<8x1xf32> to vector<8x256xf32>
    %143 = arith.subf %135, %142 : vector<8x256xf32>
    %144 = arith.mulf %143, %143 : vector<8x256xf32>
    %cst_51 = arith.constant dense<0.000000e+00> : vector<8xf32>
    %145 = vector.multi_reduction <add>, %144, %cst_51 [1] : vector<8x256xf32> to vector<8xf32>
    %146 = vector.shape_cast %145 : vector<8xf32> to vector<8x1xf32>
    %cst_52 = arith.constant 2.560000e+02 : f32
    %147 = vector.broadcast %cst_52 : f32 to vector<8x1xf32>
    %148 = arith.divf %146, %147 : vector<8x1xf32>
    %cst_53 = arith.constant 9.99999974E-6 : f32
    %149 = vector.broadcast %cst_53 : f32 to vector<8x1xf32>
    %150 = arith.addf %148, %149 : vector<8x1xf32>
    %151 = math.rsqrt %150 : vector<8x1xf32>
    %152 = arith.mulf %136, %151 : vector<8x1xf32>
    %153 = arith.mulf %141, %152 : vector<8x1xf32>
    %154 = arith.subf %137, %153 : vector<8x1xf32>
    %155 = vector.broadcast %152 : vector<8x1xf32> to vector<8x256xf32>
    %156 = arith.mulf %135, %155 : vector<8x256xf32>
    %157 = vector.broadcast %154 : vector<8x1xf32> to vector<8x256xf32>
    %158 = arith.addf %156, %157 : vector<8x256xf32>
    %cst_54 = arith.constant 0.000000e+00 : f32
    %159 = vector.broadcast %cst_54 : f32 to vector<8x256xf32>
    %160 = arith.maximumf %158, %159 : vector<8x256xf32>
    %c0_55 = arith.constant 0 : index
    %c0_56 = arith.constant 0 : index
    %161 = vector.load %arg8[%c0_55, %c0_56] : memref<16x40xbf16, #tpu.memory_space<vmem>>, vector<16x40xbf16>
    %c2_i32_57 = arith.constant 2 : i32
    %162 = tpu.dynamic_rotate %160 by %c2_i32_57 dim 1 : vector<8x256xf32>, i32 -> vector<8x256xf32>
    %cst_58 = arith.constant 0.000000e+00 : f32
    %163 = vector.shape_cast %10 : vector<1x256xi1> to vector<1x256xi1>
    %164 = vector.broadcast %163 : vector<1x256xi1> to vector<8x256xi1>
    %165 = vector.broadcast %cst_58 : f32 to vector<8x256xf32>
    %166 = arith.select %164, %162, %165 : vector<8x256xi1>, vector<8x256xf32>
    %c1_i32_59 = arith.constant 1 : i32
    %167 = tpu.dynamic_rotate %160 by %c1_i32_59 dim 1 : vector<8x256xf32>, i32 -> vector<8x256xf32>
    %cst_60 = arith.constant 0.000000e+00 : f32
    %168 = vector.shape_cast %12 : vector<1x256xi1> to vector<1x256xi1>
    %169 = vector.broadcast %168 : vector<1x256xi1> to vector<8x256xi1>
    %170 = vector.broadcast %cst_60 : f32 to vector<8x256xf32>
    %171 = arith.select %169, %167, %170 : vector<8x256xi1>, vector<8x256xf32>
    %c255_i32_61 = arith.constant 255 : i32
    %172 = tpu.dynamic_rotate %160 by %c255_i32_61 dim 1 : vector<8x256xf32>, i32 -> vector<8x256xf32>
    %cst_62 = arith.constant 0.000000e+00 : f32
    %173 = vector.shape_cast %14 : vector<1x256xi1> to vector<1x256xi1>
    %174 = vector.broadcast %173 : vector<1x256xi1> to vector<8x256xi1>
    %175 = vector.broadcast %cst_62 : f32 to vector<8x256xf32>
    %176 = arith.select %174, %172, %175 : vector<8x256xi1>, vector<8x256xf32>
    %c254_i32_63 = arith.constant 254 : i32
    %177 = tpu.dynamic_rotate %160 by %c254_i32_63 dim 1 : vector<8x256xf32>, i32 -> vector<8x256xf32>
    %cst_64 = arith.constant 0.000000e+00 : f32
    %178 = vector.shape_cast %16 : vector<1x256xi1> to vector<1x256xi1>
    %179 = vector.broadcast %178 : vector<1x256xi1> to vector<8x256xi1>
    %180 = vector.broadcast %cst_64 : f32 to vector<8x256xf32>
    %181 = arith.select %179, %177, %180 : vector<8x256xi1>, vector<8x256xf32>
    %182 = tpu.concatenate %166, %171, %160, %176, %181 in 0 : vector<8x256xf32>, vector<8x256xf32>, vector<8x256xf32>, vector<8x256xf32>, vector<8x256xf32> -> vector<40x256xf32>
    %183 = arith.truncf %182 : vector<40x256xf32> to vector<40x256xbf16>
    %cst_65 = arith.constant dense<0.000000e+00> : vector<16x256xf32>
    %184 = tpu.matmul %161, %183, %cst_65 {dimension_numbers = #tpu.dot_dimension_numbers<[1], [0], [0], [1], [0, 0, 1, 1], [], []>} : vector<16x40xbf16>, vector<40x256xbf16>, vector<16x256xf32> -> vector<16x256xf32>
    %c0_66 = arith.constant 0 : index
    %c0_67 = arith.constant 0 : index
    %185 = vector.load %arg9[%c0_66, %c0_67] : memref<16x1xf32, #tpu.memory_space<vmem>>, vector<16x1xf32>
    %186 = vector.broadcast %185 : vector<16x1xf32> to vector<16x256xf32>
    %187 = arith.addf %184, %186 : vector<16x256xf32>
    %188 = arith.addf %187, %86 : vector<16x256xf32>
    %cst_68 = arith.constant 0.000000e+00 : f32
    %189 = vector.broadcast %cst_68 : f32 to vector<16x256xf32>
    %190 = arith.maximumf %188, %189 : vector<16x256xf32>
    %c0_69 = arith.constant 0 : index
    %c0_70 = arith.constant 0 : index
    %191 = vector.load %arg10[%c0_69, %c0_70] : memref<16x1xf32, #tpu.memory_space<vmem>>, vector<16x1xf32>
    %c0_71 = arith.constant 0 : index
    %c0_72 = arith.constant 0 : index
    %192 = vector.load %arg11[%c0_71, %c0_72] : memref<16x1xf32, #tpu.memory_space<vmem>>, vector<16x1xf32>
    %cst_73 = arith.constant dense<0.000000e+00> : vector<16xf32>
    %193 = vector.multi_reduction <add>, %190, %cst_73 [1] : vector<16x256xf32> to vector<16xf32>
    %194 = vector.shape_cast %193 : vector<16xf32> to vector<16x1xf32>
    %cst_74 = arith.constant 2.560000e+02 : f32
    %195 = vector.broadcast %cst_74 : f32 to vector<16x1xf32>
    %196 = arith.divf %194, %195 : vector<16x1xf32>
    %197 = vector.broadcast %196 : vector<16x1xf32> to vector<16x256xf32>
    %198 = arith.subf %190, %197 : vector<16x256xf32>
    %199 = arith.mulf %198, %198 : vector<16x256xf32>
    %cst_75 = arith.constant dense<0.000000e+00> : vector<16xf32>
    %200 = vector.multi_reduction <add>, %199, %cst_75 [1] : vector<16x256xf32> to vector<16xf32>
    %201 = vector.shape_cast %200 : vector<16xf32> to vector<16x1xf32>
    %cst_76 = arith.constant 2.560000e+02 : f32
    %202 = vector.broadcast %cst_76 : f32 to vector<16x1xf32>
    %203 = arith.divf %201, %202 : vector<16x1xf32>
    %cst_77 = arith.constant 9.99999974E-6 : f32
    %204 = vector.broadcast %cst_77 : f32 to vector<16x1xf32>
    %205 = arith.addf %203, %204 : vector<16x1xf32>
    %206 = math.rsqrt %205 : vector<16x1xf32>
    %207 = arith.mulf %191, %206 : vector<16x1xf32>
    %208 = arith.mulf %196, %207 : vector<16x1xf32>
    %209 = arith.subf %192, %208 : vector<16x1xf32>
    %210 = vector.broadcast %207 : vector<16x1xf32> to vector<16x256xf32>
    %211 = arith.mulf %190, %210 : vector<16x256xf32>
    %212 = vector.broadcast %209 : vector<16x1xf32> to vector<16x256xf32>
    %213 = arith.addf %211, %212 : vector<16x256xf32>
    %214 = vector.extract_strided_slice %213 {offsets = [0, 0], sizes = [16, 128], strides = [1, 1]} : vector<16x256xf32> to vector<16x128xf32>
    %c0_78 = arith.constant 0 : index
    %c0_79 = arith.constant 0 : index
    %c0_80 = arith.constant 0 : index
    %215 = vector.load %arg12[%c0_78, %c0_79, %c0_80] : memref<2x16x128xf32, #tpu.memory_space<vmem>>, vector<1x16x128xf32>
    %216 = vector.shape_cast %215 : vector<1x16x128xf32> to vector<16x128xf32>
    %217 = vector.shape_cast %214 : vector<16x128xf32> to vector<1x16x128xf32>
    tpu.vector_store %arg12[%c0_78, %c0_79, %c0_80], %217 {strides = array<i32>} : memref<2x16x128xf32, #tpu.memory_space<vmem>>, vector<1x16x128xf32>,
    %218 = vector.extract_strided_slice %213 {offsets = [0, 128], sizes = [16, 128], strides = [1, 1]} : vector<16x256xf32> to vector<16x128xf32>
    %c1_81 = arith.constant 1 : index
    %c0_82 = arith.constant 0 : index
    %c0_83 = arith.constant 0 : index
    %219 = vector.load %arg12[%c1_81, %c0_82, %c0_83] : memref<2x16x128xf32, #tpu.memory_space<vmem>>, vector<1x16x128xf32>
    %220 = vector.shape_cast %219 : vector<1x16x128xf32> to vector<16x128xf32>
    %221 = vector.shape_cast %218 : vector<16x128xf32> to vector<1x16x128xf32>
    tpu.vector_store %arg12[%c1_81, %c0_82, %c0_83], %221 {strides = array<i32>} : memref<2x16x128xf32, #tpu.memory_space<vmem>>, vector<1x16x128xf32>,
    return
  }
}

</mosaic_0001>

<llo_original>
// kernel: tpu_custom_call.1
$region0: #{tpu_custom_call.1}
  #allocation0 [shape = 'u32[]', space=smem, size = 0x4, offset = 0x4, fixed_abs, tag = 'smem constant byte address 0x4 - core index']
  #allocation1 [shape = 'u32[144,128]{1,0:T(1,128)}', space=vmem, size = 0x12000, scoped, tag = 'internal scratch']
  %s0 = inlined_call_operand.vmem [shape: f32[2,8,128], index: 0, kind: input, shape index: {}]
  %s1 = inlined_call_operand.vmem [shape: bf16[24,88], index: 1, kind: input, shape index: {}]
  %s2 = inlined_call_operand.vmem [shape: f32[16,1], index: 2, kind: input, shape index: {}]
  %s3 = inlined_call_operand.vmem [shape: f32[8,1], index: 3, kind: input, shape index: {}]
  %s4 = inlined_call_operand.vmem [shape: f32[8,1], index: 4, kind: input, shape index: {}]
  %s5 = inlined_call_operand.vmem [shape: bf16[8,40], index: 5, kind: input, shape index: {}]
  %s6 = inlined_call_operand.vmem [shape: f32[8,1], index: 6, kind: input, shape index: {}]
  %s7 = inlined_call_operand.vmem [shape: f32[8,1], index: 7, kind: input, shape index: {}]
  %s8 = inlined_call_operand.vmem [shape: bf16[16,40], index: 8, kind: input, shape index: {}]
  %s9 = inlined_call_operand.vmem [shape: f32[16,1], index: 9, kind: input, shape index: {}]
  %s10 = inlined_call_operand.vmem [shape: f32[16,1], index: 10, kind: input, shape index: {}]
  %s11 = inlined_call_operand.vmem [shape: f32[16,1], index: 11, kind: input, shape index: {}]
  %s12 = inlined_call_operand.hbm [shape: f32[2,16,128], index: 12, kind: output, shape index: {}]
  %s13 = sld [smem:[#allocation0]]
  $region58: #{tpu_custom_call.1} parent=0
    _
  %s15 = ssub.s32 1, %s13
  %s16 = scalar_select 0, %s15, %s13
  $region1: #{tpu_custom_call.1} parent=0
    #allocation2 [shape = 'u8[16384]{0}', space=vmem, size = 0x4000, scoped, tag = 'output window, operand 0, single buffered']
    #allocation3 [shape = 's32[1]{0}', space=sflag, size = 0x4, scoped, tag = 'scoped memory for tpu_custom_call.1']
    %17 = vsyncpa [#allocation3], 0
    // Predicated region
    $region2: #{tpu_custom_call.1} parent=1 // pred_check
      _
    $region3: #{tpu_custom_call.1} parent=1 // pred_check_branch
      %19 = sbr.rel (0) target = $region5
    $region4: #{tpu_custom_call.1} parent=1 // pred_region
      _
    $region5: #{tpu_custom_call.1} parent=1 // pred_fallthru
      _
    // Predicated region
    $region6: #{tpu_custom_call.1} parent=1 // pred_check
      _
    $region7: #{tpu_custom_call.1} parent=1 // pred_check_branch
      %21 = sbr.rel (0) target = $region9
    $region8: #{tpu_custom_call.1} parent=1 // pred_region
      _
    $region9: #{tpu_custom_call.1} parent=1 // pred_fallthru
      _
    // Predicated region
    $region10: #{tpu_custom_call.1} parent=1 // pred_check
      _
    $region11: #{tpu_custom_call.1} parent=1 // pred_check_branch
      %23 = sbr.rel (0) target = $region13
    $region12: #{tpu_custom_call.1} parent=1 // pred_region
      _
    $region13: #{tpu_custom_call.1} parent=1 // pred_fallthru
      _
    // Predicated region
    $region14: #{tpu_custom_call.1} parent=1 // pred_check
      _
    $region15: #{tpu_custom_call.1} parent=1 // pred_check_branch
      %25 = sbr.rel (0) target = $region17
    $region16: #{tpu_custom_call.1} parent=1 // pred_region
      _
    $region17: #{tpu_custom_call.1} parent=1 // pred_fallthru
      _
    // Predicated region
    $region18: #{tpu_custom_call.1} parent=1 // pred_check
      _
    $region19: #{tpu_custom_call.1} parent=1 // pred_check_branch
      %27 = sbr.rel (0) target = $region21
    $region20: #{tpu_custom_call.1} parent=1 // pred_region
      _
    $region21: #{tpu_custom_call.1} parent=1 // pred_fallthru
      _
    // Predicated region
    $region22: #{tpu_custom_call.1} parent=1 // pred_check
      _
    $region23: #{tpu_custom_call.1} parent=1 // pred_check_branch
      %29 = sbr.rel (0) target = $region25
    $region24: #{tpu_custom_call.1} parent=1 // pred_region
      _
    $region25: #{tpu_custom_call.1} parent=1 // pred_fallthru
      _
    // Predicated region
    $region26: #{tpu_custom_call.1} parent=1 // pred_check
      _
    $region27: #{tpu_custom_call.1} parent=1 // pred_check_branch
      %31 = sbr.rel (0) target = $region29
    $region28: #{tpu_custom_call.1} parent=1 // pred_region
      _
    $region29: #{tpu_custom_call.1} parent=1 // pred_fallthru
      _
    // Predicated region
    $region30: #{tpu_custom_call.1} parent=1 // pred_check
      _
    $region31: #{tpu_custom_call.1} parent=1 // pred_check_branch
      %33 = sbr.rel (0) target = $region33
    $region32: #{tpu_custom_call.1} parent=1 // pred_region
      _
    $region33: #{tpu_custom_call.1} parent=1 // pred_fallthru
      _
    // Predicated region
    $region34: #{tpu_custom_call.1} parent=1 // pred_check
      _
    $region35: #{tpu_custom_call.1} parent=1 // pred_check_branch
      %35 = sbr.rel (0) target = $region37
    $region36: #{tpu_custom_call.1} parent=1 // pred_region
      _
    $region37: #{tpu_custom_call.1} parent=1 // pred_fallthru
      _
    // Predicated region
    $region38: #{tpu_custom_call.1} parent=1 // pred_check
      _
    $region39: #{tpu_custom_call.1} parent=1 // pred_check_branch
      %37 = sbr.rel (0) target = $region41
    $region40: #{tpu_custom_call.1} parent=1 // pred_region
      _
    $region41: #{tpu_custom_call.1} parent=1 // pred_fallthru
      _
    // Predicated region
    $region42: #{tpu_custom_call.1} parent=1 // pred_check
      _
    $region43: #{tpu_custom_call.1} parent=1 // pred_check_branch
      %39 = sbr.rel (0) target = $region45
    $region44: #{tpu_custom_call.1} parent=1 // pred_region
      _
    $region45: #{tpu_custom_call.1} parent=1 // pred_fallthru
      _
    // Predicated region
    $region46: #{tpu_custom_call.1} parent=1 // pred_check
      _
    $region47: #{tpu_custom_call.1} parent=1 // pred_check_branch
      %41 = sbr.rel (0) target = $region49
    $region48: #{tpu_custom_call.1} parent=1 // pred_region
      _
    $region49: #{tpu_custom_call.1} parent=1 // pred_fallthru
      _
    %v43 = vlaneseq
    %v44 = vand.u32 %v43, 127
    %v45 = vadd.s32 %v44, 128
    %v46 = vand.u32 %v44, 127
    %v47 = vand.u32 %v45, 127
    %vm48 = vcmp.ge.s32.totalorder %v46, 5
    %vm49 = vcmp.ge.s32.totalorder %v47, 5
    %vm50 = vcmp.ge.s32.totalorder %v46, 4
    %vm51 = vcmp.ge.s32.totalorder %v47, 4
    %vm52 = vcmp.ge.s32.totalorder %v46, 3
    %vm53 = vcmp.ge.s32.totalorder %v47, 3
    %vm54 = vcmp.ge.s32.totalorder %v46, 2
    %vm55 = vcmp.ge.s32.totalorder %v47, 2
    %vm56 = vcmp.ge.s32.totalorder %v46, 1
    %vm57 = vcmp.ge.s32.totalorder %v47, 1
    %vm58 = vcmp.lt.s32.totalorder %v46, 127
    %vm59 = vcmp.lt.s32.totalorder %v47, 127
    %vm60 = vcmp.lt.s32.totalorder %v46, 126
    %vm61 = vcmp.lt.s32.totalorder %v47, 126
    %vm62 = vcmp.lt.s32.totalorder %v46, 125
    %vm63 = vcmp.lt.s32.totalorder %v47, 125
    %vm64 = vcmp.lt.s32.totalorder %v46, 124
    %vm65 = vcmp.lt.s32.totalorder %v47, 124
    %vm66 = vcmp.lt.s32.totalorder %v46, 123
    %vm67 = vcmp.lt.s32.totalorder %v47, 123
    %v68 = vld [vmem:[%s0] sm:$0xff]
    %s69 = scalar_lea.vmem %s0, 8
    %v70 = vld [vmem:[%s69] sm:$0xff]
    %v71 = vld [vmem:[%s1] sm:$0xf]
    %v72 = vld [vmem:[%s1 + $0x4] sm:$0xf]
    %v73 = vld [vmem:[%s1 + $0x8] sm:$0xf]
    %74 = vrot.lane.b32.xlu0 %v68, 5
    %v75 = vpop.permute.xlu0 %74
    %76 = vrot.lane.b32.xlu0 %v70, 5
    %v77 = vpop.permute.xlu0 %76
    %vm78 = vcmp.lt.s32.totalorder %v44, 5
    %v79 = vsel %vm78, %v75, %v77
    %v80 = vsel %vm78, %v77, %v75
    %v81 = vsel %vm48, 1, 0
    %v82 = vsel %vm49, 1, 0
    %vm83 = vcmp.eq.s32.totalorder %v81, 1
    %vm84 = vcmp.eq.s32.totalorder %v82, 1
    %v85 = vsel %vm83, %v80, 0.0
    %v86 = vsel %vm84, %v79, 0.0
    %87 = vrot.lane.b32.xlu0 %v68, 4
    %v88 = vpop.permute.xlu0 %87
    %89 = vrot.lane.b32.xlu0 %v70, 4
    %v90 = vpop.permute.xlu0 %89
    %vm91 = vcmp.lt.s32.totalorder %v44, 4
    %v92 = vsel %vm91, %v88, %v90
    %v93 = vsel %vm91, %v90, %v88
    %v94 = vsel %vm50, 1, 0
    %v95 = vsel %vm51, 1, 0
    %vm96 = vcmp.eq.s32.totalorder %v94, 1
    %vm97 = vcmp.eq.s32.totalorder %v95, 1
    %v98 = vsel %vm96, %v93, 0.0
    %v99 = vsel %vm97, %v92, 0.0
    %100 = vrot.lane.b32.xlu0 %v68, 3
    %v101 = vpop.permute.xlu0 %100
    %102 = vrot.lane.b32.xlu0 %v70, 3
    %v103 = vpop.permute.xlu0 %102
    %vm104 = vcmp.lt.s32.totalorder %v44, 3
    %v105 = vsel %vm104, %v101, %v103
    %v106 = vsel %vm104, %v103, %v101
    %v107 = vsel %vm52, 1, 0
    %v108 = vsel %vm53, 1, 0
    %vm109 = vcmp.eq.s32.totalorder %v107, 1
    %vm110 = vcmp.eq.s32.totalorder %v108, 1
    %v111 = vsel %vm109, %v106, 0.0
    %v112 = vsel %vm110, %v105, 0.0
    %113 = vrot.lane.b32.xlu0 %v68, 2
    %v114 = vpop.permute.xlu0 %113
    %115 = vrot.lane.b32.xlu0 %v70, 2
    %v116 = vpop.permute.xlu0 %115
    %vm117 = vcmp.lt.s32.totalorder %v44, 2
    %v118 = vsel %vm117, %v114, %v116
    %v119 = vsel %vm117, %v116, %v114
    %v120 = vsel %vm54, 1, 0
    %v121 = vsel %vm55, 1, 0
    %vm122 = vcmp.eq.s32.totalorder %v120, 1
    %vm123 = vcmp.eq.s32.totalorder %v121, 1
    %v124 = vsel %vm122, %v119, 0.0
    %v125 = vsel %vm123, %v118, 0.0
    %126 = vrot.lane.b32.xlu0 %v68, 1
    %v127 = vpop.permute.xlu0 %126
    %128 = vrot.lane.b32.xlu0 %v70, 1
    %v129 = vpop.permute.xlu0 %128
    %vm130 = vcmp.lt.s32.totalorder %v44, 1
    %v131 = vsel %vm130, %v127, %v129
    %v132 = vsel %vm130, %v129, %v127
    %v133 = vsel %vm56, 1, 0
    %v134 = vsel %vm57, 1, 0
    %vm135 = vcmp.eq.s32.totalorder %v133, 1
    %vm136 = vcmp.eq.s32.totalorder %v134, 1
    %v137 = vsel %vm135, %v132, 0.0
    %v138 = vsel %vm136, %v131, 0.0
    %139 = vrot.lane.b32.xlu0 %v68, 127
    %v140 = vpop.permute.xlu0 %139
    %141 = vrot.lane.b32.xlu0 %v70, 127
    %v142 = vpop.permute.xlu0 %141
    %vm143 = vcmp.lt.s32.totalorder %v44, 127
    %v144 = vsel %vm143, %v140, %v142
    %v145 = vsel %vm143, %v142, %v140
    %v146 = vsel %vm58, 1, 0
    %v147 = vsel %vm59, 1, 0
    %vm148 = vcmp.eq.s32.totalorder %v146, 1
    %vm149 = vcmp.eq.s32.totalorder %v147, 1
    %v150 = vsel %vm148, %v144, 0.0
    %v151 = vsel %vm149, %v145, 0.0
    %152 = vrot.lane.b32.xlu0 %v68, 126
    %v153 = vpop.permute.xlu0 %152
    %154 = vrot.lane.b32.xlu0 %v70, 126
    %v155 = vpop.permute.xlu0 %154
    %vm156 = vcmp.lt.s32.totalorder %v44, 126
    %v157 = vsel %vm156, %v153, %v155
    %v158 = vsel %vm156, %v155, %v153
    %v159 = vsel %vm60, 1, 0
    %v160 = vsel %vm61, 1, 0
    %vm161 = vcmp.eq.s32.totalorder %v159, 1
    %vm162 = vcmp.eq.s32.totalorder %v160, 1
    %v163 = vsel %vm161, %v157, 0.0
    %v164 = vsel %vm162, %v158, 0.0
    %165 = vrot.lane.b32.xlu0 %v68, 125
    %v166 = vpop.permute.xlu0 %165
    %167 = vrot.lane.b32.xlu0 %v70, 125
    %v168 = vpop.permute.xlu0 %167
    %vm169 = vcmp.lt.s32.totalorder %v44, 125
    %v170 = vsel %vm169, %v166, %v168
    %v171 = vsel %vm169, %v168, %v166
    %v172 = vsel %vm62, 1, 0
    %v173 = vsel %vm63, 1, 0
    %vm174 = vcmp.eq.s32.totalorder %v172, 1
    %vm175 = vcmp.eq.s32.totalorder %v173, 1
    %v176 = vsel %vm174, %v170, 0.0
    %v177 = vsel %vm175, %v171, 0.0
    %178 = vrot.lane.b32.xlu0 %v68, 124
    %v179 = vpop.permute.xlu0 %178
    %180 = vrot.lane.b32.xlu0 %v70, 124
    %v181 = vpop.permute.xlu0 %180
    %vm182 = vcmp.lt.s32.totalorder %v44, 124
    %v183 = vsel %vm182, %v179, %v181
    %v184 = vsel %vm182, %v181, %v179
    %v185 = vsel %vm64, 1, 0
    %v186 = vsel %vm65, 1, 0
    %vm187 = vcmp.eq.s32.totalorder %v185, 1
    %vm188 = vcmp.eq.s32.totalorder %v186, 1
    %v189 = vsel %vm187, %v183, 0.0
    %v190 = vsel %vm188, %v184, 0.0
    %191 = vrot.lane.b32.xlu0 %v68, 123
    %v192 = vpop.permute.xlu0 %191
    %193 = vrot.lane.b32.xlu0 %v70, 123
    %v194 = vpop.permute.xlu0 %193
    %vm195 = vcmp.lt.s32.totalorder %v44, 123
    %v196 = vsel %vm195, %v192, %v194
    %v197 = vsel %vm195, %v194, %v192
    %v198 = vsel %vm66, 1, 0
    %v199 = vsel %vm67, 1, 0
    %vm200 = vcmp.eq.s32.totalorder %v198, 1
    %vm201 = vcmp.eq.s32.totalorder %v199, 1
    %v202 = vsel %vm200, %v196, 0.0
    %v203 = vsel %vm201, %v197, 0.0
    %v204 = vpack.c.bf16 %v98, %v85
    %v205 = vpack.c.bf16 %v99, %v86
    %v206 = vpack.c.bf16 %v124, %v111
    %v207 = vpack.c.bf16 %v125, %v112
    %v208 = vpack.c.bf16 %v68, %v137
    %v209 = vpack.c.bf16 %v70, %v138
    %v210 = vpack.c.bf16 %v163, %v150
    %v211 = vpack.c.bf16 %v164, %v151
    %v212 = vpack.c.bf16 %v189, %v176
    %v213 = vpack.c.bf16 %v190, %v177
    %v214 = vpack.c.bf16 %v202, %v202
    %v215 = vpack.c.bf16 %v203, %v203
    %v219 = vunpack.c.l.b16 %v71
    %v220 = vunpack.c.l.b16 %v72
    %v221 = vunpack.c.l.b16 %v73
    %v222 = vpack.c.b16 %v220, %v219
    %v223 = vpack.c.b16 %v221, %v221
    %vm224 = vcmask 719872
    %v226 = vsel %vm224, %v222, 0
    %v229 = vsel %vm224, %v223, 0
    %vm231 = vcmask 1043456
    %v233 = vsel %vm231, %v214, 0
    %v236 = vsel %vm231, %v215, 0
    %238 = vmatprep.subr.bf16.mxu0 0
    %239 = vmatpush1.bf16.msra.mxu0 0
    %240 = vmatprep.subr.bf16.mxu0 0
    %241 = vmatpush1.bf16.msra.mxu0 0
    %242 = vmatprep.subr.bf16.mxu0 %v236
    %243 = vmatpush1.bf16.msra.mxu0 %v233
    %244 = vmatprep.subr.bf16.mxu0 %v213
    %245 = vmatpush1.bf16.msra.mxu0 %v212
    %246 = vmatprep.subr.bf16.mxu0 %v211
    %247 = vmatpush1.bf16.msra.mxu0 %v210
    %248 = vmatprep.subr.bf16.mxu0 %v209
    %249 = vmatpush1.bf16.msra.mxu0 %v208
    %250 = vmatprep.subr.bf16.mxu0 %v207
    %251 = vmatpush1.bf16.msra.mxu0 %v206
    %252 = vmatprep.subr.bf16.mxu0 %v205
    %253 = vmatpush1.bf16.msra.mxu0 %v204
    %254 = vmatprep.subr.bf16.mxu0 0
    %255 = vmatpush2.bf16.msra.mxu0 0
    %256 = vmatprep.subr.bf16.mxu0 0
    %257 = vmatpush2.bf16.msra.mxu0 0
    %258 = vmatprep.subr.bf16.mxu0 0
    %259 = vmatpush2.bf16.msra.mxu0 0
    %260 = vmatprep.subr.bf16.mxu0 0
    %261 = vmatpush2.bf16.msra.mxu0 0
    %262 = vmatprep.subr.bf16.mxu0 0
    %263 = vmatpush2.bf16.msra.mxu0 0
    %264 = vmatprep.subr.bf16.mxu0 0
    %265 = vmatpush2.bf16.msra.mxu0 0
    %266 = vmatprep.subr.bf16.mxu0 0
    %267 = vmatpush2.bf16.msra.mxu0 0
    %268 = vmatprep.subr.bf16.mxu0 0
    %269 = vmatpush2.bf16.msra.mxu0 0
    %270 = vmatprep.mubr.bf16.mxu0 0
    %271 = vmatmul.mubr.bf16.gmra.mxu0 %v226
    %v272 = vpop.f32.mrf.mxu0
    %v273 = vadd.f32 0.0, %v272
    %v274 = vpop.f32.mrf.mxu0
    %v275 = vadd.f32 0.0, %v274
    %v276 = vpop.f32.mrf.mxu0
    %v277 = vadd.f32 0.0, %v276
    %v278 = vpop.f32.mrf.mxu0
    %v279 = vadd.f32 0.0, %v278
    %280 = vmatprep.mubr.bf16.mxu0 0
    %281 = vmatmul.mubr.bf16.gmra.mxu0 %v229
    %v282 = vpop.f32.mrf.mxu0
    %v283 = vadd.f32 0.0, %v282
    %v284 = vpop.f32.mrf.mxu0
    %v285 = vadd.f32 0.0, %v284
    %v286 = vpop.f32.mrf.mxu0
    %v287 = vpop.f32.mrf.mxu0
    %288 = vdwg.mxu0
    %v289 = vld [vmem:[%s2] sm:$0xff]
    %v290 = vld [vmem:[%s2 + $0x8] sm:$0xff]
    %292 = vset.pattern.permute.xlu0 0
    %293 = vperm.xlu0 %292, %v289
    %v294 = vpop.permute.xlu0 %293
    %297 = vset.pattern.permute.xlu0 0
    %298 = vperm.xlu0 %297, %v290
    %v299 = vpop.permute.xlu0 %298
    %v301 = vadd.f32 %v277, %v294
    %v302 = vadd.f32 %v279, %v294
    %v303 = vadd.f32 %v283, %v299
    %v304 = vadd.f32 %v285, %v299
    %v305 = vld [vmem:[%s3] sm:$0xff]
    %v306 = vld [vmem:[%s4] sm:$0xff]
    %v307 = vadd.f32 %v273, %v275
    %308 = vadd.xlane.f32.xlu0 %v307
    %v309 = vpop.xlane.xlu0 %308
    %v310 = vrcp.pop 256.0
    %v311 = vmul.f32 %v309, %v310
    %v312 = vsub.f32 %v273, %v311
    %v313 = vsub.f32 %v275, %v311
    %v314 = vmul.f32 %v312, %v312
    %v315 = vmul.f32 %v313, %v313
    %v316 = vadd.f32 %v314, %v315
    %317 = vadd.xlane.f32.xlu0 %v316
    %v318 = vpop.xlane.xlu0 %317
    %v319 = vmul.f32 %v318, %v310
    %v320 = vadd.f32 %v319, 1e-05
    %v321 = vrsqrt.pop %v320
    %v322 = vmul.f32 %v305, %v321
    %v323 = vmul.f32 %v311, %v322
    %v324 = vsub.f32 %v306, %v323
    %326 = vset.pattern.permute.xlu0 0
    %327 = vperm.xlu0 %326, %v322
    %v328 = vpop.permute.xlu0 %327
    %v330 = vmul.f32 %v273, %v328
    %v331 = vmul.f32 %v275, %v328
    %333 = vset.pattern.permute.xlu0 0
    %334 = vperm.xlu0 %333, %v324
    %v335 = vpop.permute.xlu0 %334
    %v337 = vadd.f32 %v330, %v335
    %v338 = vadd.f32 %v331, %v335
    %v339 = vmax.f32 %v337, 0.0
    %v340 = vmax.f32 %v338, 0.0
    %v341 = vld [vmem:[%s5] sm:$0xf]
    %342 = vrot.lane.b32.xlu0 %v339, 2
    %v343 = vpop.permute.xlu0 %342
    %344 = vrot.lane.b32.xlu0 %v340, 2
    %v345 = vpop.permute.xlu0 %344
    %v346 = vsel %vm117, %v343, %v345
    %v347 = vsel %vm117, %v345, %v343
    %v348 = vsel %vm122, %v347, 0.0
    %v349 = vsel %vm123, %v346, 0.0
    %350 = vrot.lane.b32.xlu0 %v339, 1
    %v351 = vpop.permute.xlu0 %350
    %352 = vrot.lane.b32.xlu0 %v340, 1
    %v353 = vpop.permute.xlu0 %352
    %v354 = vsel %vm130, %v351, %v353
    %v355 = vsel %vm130, %v353, %v351
    %v356 = vsel %vm135, %v355, 0.0
    %v357 = vsel %vm136, %v354, 0.0
    %358 = vrot.lane.b32.xlu0 %v339, 127
    %v359 = vpop.permute.xlu0 %358
    %360 = vrot.lane.b32.xlu0 %v340, 127
    %v361 = vpop.permute.xlu0 %360
    %v362 = vsel %vm143, %v359, %v361
    %v363 = vsel %vm143, %v361, %v359
    %v364 = vsel %vm148, %v362, 0.0
    %v365 = vsel %vm149, %v363, 0.0
    %366 = vrot.lane.b32.xlu0 %v339, 126
    %v367 = vpop.permute.xlu0 %366
    %368 = vrot.lane.b32.xlu0 %v340, 126
    %v369 = vpop.permute.xlu0 %368
    %v370 = vsel %vm156, %v367, %v369
    %v371 = vsel %vm156, %v369, %v367
    %v372 = vsel %vm161, %v370, 0.0
    %v373 = vsel %vm162, %v371, 0.0
    %v374 = vpack.c.bf16 %v356, %v348
    %v375 = vpack.c.bf16 %v357, %v349
    %v376 = vpack.c.bf16 %v364, %v339
    %v377 = vpack.c.bf16 %v365, %v340
    %v378 = vpack.c.bf16 %v372, %v372
    %v379 = vpack.c.bf16 %v373, %v373
    %vm380 = vcmask 326656
    %v382 = vsel %vm380, %v341, 0
    %v385 = vsel %vm231, %v378, 0
    %v388 = vsel %vm231, %v379, 0
    %390 = vmatprep.subr.bf16.mxu0 0
    %391 = vmatpush1.bf16.msra.mxu0 0
    %392 = vmatprep.subr.bf16.mxu0 0
    %393 = vmatpush1.bf16.msra.mxu0 0
    %394 = vmatprep.subr.bf16.mxu0 0
    %395 = vmatpush1.bf16.msra.mxu0 0
    %396 = vmatprep.subr.bf16.mxu0 0
    %397 = vmatpush1.bf16.msra.mxu0 0
    %398 = vmatprep.subr.bf16.mxu0 0
    %399 = vmatpush1.bf16.msra.mxu0 0
    %400 = vmatprep.subr.bf16.mxu0 %v388
    %401 = vmatpush1.bf16.msra.mxu0 %v385
    %402 = vmatprep.subr.bf16.mxu0 %v377
    %403 = vmatpush1.bf16.msra.mxu0 %v376
    %404 = vmatprep.subr.bf16.mxu0 %v375
    %405 = vmatpush1.bf16.msra.mxu0 %v374
    %406 = vmatprep.subr.bf16.mxu0 0
    %407 = vmatpush2.bf16.msra.mxu0 0
    %408 = vmatprep.subr.bf16.mxu0 0
    %409 = vmatpush2.bf16.msra.mxu0 0
    %410 = vmatprep.subr.bf16.mxu0 0
    %411 = vmatpush2.bf16.msra.mxu0 0
    %412 = vmatprep.subr.bf16.mxu0 0
    %413 = vmatpush2.bf16.msra.mxu0 0
    %414 = vmatprep.subr.bf16.mxu0 0
    %415 = vmatpush2.bf16.msra.mxu0 0
    %416 = vmatprep.subr.bf16.mxu0 0
    %417 = vmatpush2.bf16.msra.mxu0 0
    %418 = vmatprep.subr.bf16.mxu0 0
    %419 = vmatpush2.bf16.msra.mxu0 0
    %420 = vmatprep.subr.bf16.mxu0 0
    %421 = vmatpush2.bf16.msra.mxu0 0
    %422 = vmatprep.mubr.bf16.mxu0 0
    %423 = vmatmul.mubr.bf16.gmra.mxu0 %v382
    %v424 = vpop.f32.mrf.mxu0
    %v425 = vadd.f32 0.0, %v424
    %v426 = vpop.f32.mrf.mxu0
    %v427 = vadd.f32 0.0, %v426
    %v428 = vpop.f32.mrf.mxu0
    %v429 = vpop.f32.mrf.mxu0
    %430 = vdwg.mxu0
    %v431 = vld [vmem:[%s6] sm:$0xff]
    %v432 = vld [vmem:[%s7] sm:$0xff]
    %v433 = vadd.f32 %v425, %v427
    %434 = vadd.xlane.f32.xlu0 %v433
    %v435 = vpop.xlane.xlu0 %434
    %v436 = vmul.f32 %v435, %v310
    %v437 = vsub.f32 %v425, %v436
    %v438 = vsub.f32 %v427, %v436
    %v439 = vmul.f32 %v437, %v437
    %v440 = vmul.f32 %v438, %v438
    %v441 = vadd.f32 %v439, %v440
    %442 = vadd.xlane.f32.xlu0 %v441
    %v443 = vpop.xlane.xlu0 %442
    %v444 = vmul.f32 %v443, %v310
    %v445 = vadd.f32 %v444, 1e-05
    %v446 = vrsqrt.pop %v445
    %v447 = vmul.f32 %v431, %v446
    %v448 = vmul.f32 %v436, %v447
    %v449 = vsub.f32 %v432, %v448
    %451 = vset.pattern.permute.xlu0 0
    %452 = vperm.xlu0 %451, %v447
    %v453 = vpop.permute.xlu0 %452
    %v455 = vmul.f32 %v425, %v453
    %v456 = vmul.f32 %v427, %v453
    %458 = vset.pattern.permute.xlu0 0
    %459 = vperm.xlu0 %458, %v449
    %v460 = vpop.permute.xlu0 %459
    %v462 = vadd.f32 %v455, %v460
    %v463 = vadd.f32 %v456, %v460
    %v464 = vmax.f32 %v462, 0.0
    %v465 = vmax.f32 %v463, 0.0
    %v466 = vld [vmem:[%s8] sm:$0xf]
    %v467 = vld [vmem:[%s8 + $0x4] sm:$0xf]
    %468 = vrot.lane.b32.xlu0 %v464, 2
    %v469 = vpop.permute.xlu0 %468
    %470 = vrot.lane.b32.xlu0 %v465, 2
    %v471 = vpop.permute.xlu0 %470
    %v472 = vsel %vm117, %v469, %v471
    %v473 = vsel %vm117, %v471, %v469
    %v474 = vsel %vm122, %v473, 0.0
    %v475 = vsel %vm123, %v472, 0.0
    %476 = vrot.lane.b32.xlu0 %v464, 1
    %v477 = vpop.permute.xlu0 %476
    %478 = vrot.lane.b32.xlu0 %v465, 1
    %v479 = vpop.permute.xlu0 %478
    %v480 = vsel %vm130, %v477, %v479
    %v481 = vsel %vm130, %v479, %v477
    %v482 = vsel %vm135, %v481, 0.0
    %v483 = vsel %vm136, %v480, 0.0
    %484 = vrot.lane.b32.xlu0 %v464, 127
    %v485 = vpop.permute.xlu0 %484
    %486 = vrot.lane.b32.xlu0 %v465, 127
    %v487 = vpop.permute.xlu0 %486
    %v488 = vsel %vm143, %v485, %v487
    %v489 = vsel %vm143, %v487, %v485
    %v490 = vsel %vm148, %v488, 0.0
    %v491 = vsel %vm149, %v489, 0.0
    %492 = vrot.lane.b32.xlu0 %v464, 126
    %v493 = vpop.permute.xlu0 %492
    %494 = vrot.lane.b32.xlu0 %v465, 126
    %v495 = vpop.permute.xlu0 %494
    %v496 = vsel %vm156, %v493, %v495
    %v497 = vsel %vm156, %v495, %v493
    %v498 = vsel %vm161, %v496, 0.0
    %v499 = vsel %vm162, %v497, 0.0
    %v500 = vpack.c.bf16 %v482, %v474
    %v501 = vpack.c.bf16 %v483, %v475
    %v502 = vpack.c.bf16 %v490, %v464
    %v503 = vpack.c.bf16 %v491, %v465
    %v504 = vpack.c.bf16 %v498, %v498
    %v505 = vpack.c.bf16 %v499, %v499
    %v506 = vld [vmem:[%s9] sm:$0xff]
    %v507 = vld [vmem:[%s9 + $0x8] sm:$0xff]
    %509 = vset.pattern.permute.xlu0 0
    %510 = vperm.xlu0 %509, %v506
    %v511 = vpop.permute.xlu0 %510
    %514 = vset.pattern.permute.xlu0 0
    %515 = vperm.xlu0 %514, %v507
    %v516 = vpop.permute.xlu0 %515
    %v520 = vunpack.c.l.b16 %v466
    %v521 = vunpack.c.l.b16 %v467
    %v522 = vpack.c.b16 %v521, %v520
    %v524 = vsel %vm380, %v522, 0
    %v527 = vsel %vm231, %v504, 0
    %v530 = vsel %vm231, %v505, 0
    %532 = vmatprep.subr.bf16.mxu0 0
    %533 = vmatpush1.bf16.msra.mxu0 0
    %534 = vmatprep.subr.bf16.mxu0 0
    %535 = vmatpush1.bf16.msra.mxu0 0
    %536 = vmatprep.subr.bf16.mxu0 0
    %537 = vmatpush1.bf16.msra.mxu0 0
    %538 = vmatprep.subr.bf16.mxu0 0
    %539 = vmatpush1.bf16.msra.mxu0 0
    %540 = vmatprep.subr.bf16.mxu0 0
    %541 = vmatpush1.bf16.msra.mxu0 0
    %542 = vmatprep.subr.bf16.mxu0 %v530
    %543 = vmatpush1.bf16.msra.mxu0 %v527
    %544 = vmatprep.subr.bf16.mxu0 %v503
    %545 = vmatpush1.bf16.msra.mxu0 %v502
    %546 = vmatprep.subr.bf16.mxu0 %v501
    %547 = vmatpush1.bf16.msra.mxu0 %v500
    %548 = vmatprep.subr.bf16.mxu0 0
    %549 = vmatpush2.bf16.msra.mxu0 0
    %550 = vmatprep.subr.bf16.mxu0 0
    %551 = vmatpush2.bf16.msra.mxu0 0
    %552 = vmatprep.subr.bf16.mxu0 0
    %553 = vmatpush2.bf16.msra.mxu0 0
    %554 = vmatprep.subr.bf16.mxu0 0
    %555 = vmatpush2.bf16.msra.mxu0 0
    %556 = vmatprep.subr.bf16.mxu0 0
    %557 = vmatpush2.bf16.msra.mxu0 0
    %558 = vmatprep.subr.bf16.mxu0 0
    %559 = vmatpush2.bf16.msra.mxu0 0
    %560 = vmatprep.subr.bf16.mxu0 0
    %561 = vmatpush2.bf16.msra.mxu0 0
    %562 = vmatprep.subr.bf16.mxu0 0
    %563 = vmatpush2.bf16.msra.mxu0 0
    %564 = vmatprep.mubr.bf16.mxu0 0
    %565 = vmatmul.mubr.bf16.gmra.mxu0 %v524
    %v566 = vpop.f32.mrf.mxu0
    %v567 = vadd.f32 %v511, %v566
    %v568 = vpop.f32.mrf.mxu0
    %v569 = vadd.f32 %v511, %v568
    %v570 = vpop.f32.mrf.mxu0
    %v571 = vadd.f32 %v516, %v570
    %v572 = vpop.f32.mrf.mxu0
    %v573 = vadd.f32 %v516, %v572
    %574 = vdwg.mxu0
    %v575 = vadd.f32 %v567, %v301
    %v576 = vadd.f32 %v569, %v302
    %v577 = vadd.f32 %v571, %v303
    %v578 = vadd.f32 %v573, %v304
    %v579 = vmax.f32 %v575, 0.0
    %v580 = vmax.f32 %v576, 0.0
    %v581 = vmax.f32 %v577, 0.0
    %v582 = vmax.f32 %v578, 0.0
    %v583 = vld [vmem:[%s10] sm:$0xff]
    %v584 = vld [vmem:[%s10 + $0x8] sm:$0xff]
    %v585 = vld [vmem:[%s11] sm:$0xff]
    %v586 = vld [vmem:[%s11 + $0x8] sm:$0xff]
    %v587 = vadd.f32 %v579, %v580
    %588 = vadd.xlane.f32.xlu0 %v587
    %v589 = vpop.xlane.xlu0 %588
    %v590 = vadd.f32 %v581, %v582
    %591 = vadd.xlane.f32.xlu0 %v590
    %v592 = vpop.xlane.xlu0 %591
    %v593 = vmul.f32 %v589, %v310
    %v594 = vmul.f32 %v592, %v310
    %v595 = vsub.f32 %v579, %v593
    %v596 = vsub.f32 %v580, %v593
    %v597 = vsub.f32 %v581, %v594
    %v598 = vsub.f32 %v582, %v594
    %v599 = vmul.f32 %v595, %v595
    %v600 = vmul.f32 %v596, %v596
    %v601 = vmul.f32 %v597, %v597
    %v602 = vmul.f32 %v598, %v598
    %v603 = vadd.f32 %v599, %v600
    %604 = vadd.xlane.f32.xlu0 %v603
    %v605 = vpop.xlane.xlu0 %604
    %v606 = vadd.f32 %v601, %v602
    %607 = vadd.xlane.f32.xlu0 %v606
    %v608 = vpop.xlane.xlu0 %607
    %v609 = vmul.f32 %v605, %v310
    %v610 = vmul.f32 %v608, %v310
    %v611 = vadd.f32 %v609, 1e-05
    %v612 = vadd.f32 %v610, 1e-05
    %v613 = vrsqrt.pop %v611
    %v614 = vrsqrt.pop %v612
    %v615 = vmul.f32 %v583, %v613
    %v616 = vmul.f32 %v584, %v614
    %v617 = vmul.f32 %v593, %v615
    %v618 = vmul.f32 %v594, %v616
    %v619 = vsub.f32 %v585, %v617
    %v620 = vsub.f32 %v586, %v618
    %622 = vset.pattern.permute.xlu0 0
    %623 = vperm.xlu0 %622, %v615
    %v624 = vpop.permute.xlu0 %623
    %627 = vset.pattern.permute.xlu0 0
    %628 = vperm.xlu0 %627, %v616
    %v629 = vpop.permute.xlu0 %628
    %v631 = vmul.f32 %v579, %v624
    %v632 = vmul.f32 %v580, %v624
    %v633 = vmul.f32 %v581, %v629
    %v634 = vmul.f32 %v582, %v629
    %636 = vset.pattern.permute.xlu0 0
    %637 = vperm.xlu0 %636, %v619
    %v638 = vpop.permute.xlu0 %637
    %641 = vset.pattern.permute.xlu0 0
    %642 = vperm.xlu0 %641, %v620
    %v643 = vpop.permute.xlu0 %642
    %v645 = vadd.f32 %v631, %v638
    %v646 = vadd.f32 %v632, %v638
    %v647 = vadd.f32 %v633, %v643
    %v648 = vadd.f32 %v634, %v643
    %649 = vst [vmem:[#allocation2] sm:$0xff] %v645
    %650 = vst [vmem:[#allocation2 + $0x8] sm:$0xff] %v647
    %s651 = scalar_lea.vmem [#allocation2], 16
    %652 = vst [vmem:[%s651] sm:$0xff] %v646
    %653 = vst [vmem:[%s651 + $0x8] sm:$0xff] %v648
    // Predicated region
    $region50: #{tpu_custom_call.1} parent=1 // pred_check
      _
    $region51: #{tpu_custom_call.1} parent=1 // pred_check_branch
      %655 = sbr.rel (0) target = $region53
    $region52: #{tpu_custom_call.1} parent=1 // pred_region
      %s657 = ssub.s32 512, 512
      %658 = vsyncadd [#allocation3], %s657
      %s659 = sshll.u32 [#allocation2], 4
      %s660 = int_to_ptr.vmem [resolvable:$true] %s659
      %665 = dma.vmem_to_hbm [thread:$0]  %s660, 512, %s12, [#allocation3], 128, 128, 8
    $region53: #{tpu_custom_call.1} parent=1 // pred_fallthru
      _
    // Predicated region
    $region54: #{tpu_custom_call.1} parent=1 // pred_check
      _
    $region55: #{tpu_custom_call.1} parent=1 // pred_check_branch
      %667 = sbr.rel (0) target = $region57
    $region56: #{tpu_custom_call.1} parent=1 // pred_region
      %668 = dma.done [#allocation3], 512
    $region57: #{tpu_custom_call.1} parent=1 // pred_fallthru
      _
    %669 = vsyncpa [#allocation3], 1

</llo_original>
